<compile_context>
chip_gen: v7x
topology: tpu7x:2x2x1
jax: 0.10.0
libtpu: 0.0.40
codegen_flags: <defaults>
</compile_context>

<pallas_src>
import numpy as np
import jax
import jax.numpy as jnp
from jax.experimental import pallas as pl
from jax.experimental.pallas import tpu as pltpu


def _round_up(x: int, m: int) -> int:
    return ((x + m - 1) // m) * m


def _make_kernel(num_ids: int):
    """num_ids = G*(L+1) precomputed one-hot column targets per grouped row."""

    def kernel(cols_ref, tbl_ref, out_ref):
        cols = cols_ref[...]                       # (TRg, num_ids) int32 target columns
        trg = cols.shape[0]
        k_dim = tbl_ref.shape[0]                   # K = G * n_pad, multiple of 128

        # Combined multi-hot: num_ids disjoint ones per row (cheap VPU filler).
        iota = jax.lax.broadcasted_iota(jnp.int32, (trg, k_dim), 1)
        hot = iota == cols[:, 0:1]
        for k in range(1, num_ids):
            hot = hot | (iota == cols[:, k:k + 1])

        # Single MXU matmul: (TRg, K) bf16 @ (K, G*H) bf16 -> f32 acc -> out dtype.
        acc = jnp.dot(hot.astype(jnp.bfloat16), tbl_ref[...],
                      preferred_element_type=jnp.float32)
        out_ref[...] = acc.astype(out_ref.dtype)

    return kernel


def act_embedding_multidiscrete(actions, emb_tables, weight, bias, *,
                                tile_rows=4096, out_dtype=jnp.float32):
    """actions: (B, T, L) int; emb_tables: list of (n_i, H) f32;
    weight: (H, L*H) f32 (PyTorch nn.Linear layout); bias: (H,) f32.
    Returns (B, T, H) with dtype `out_dtype`."""
    B, T, L = actions.shape
    H = weight.shape[0]
    assert weight.shape == (H, L * H)
    nvec = tuple(int(t.shape[0]) for t in emb_tables)
    n_tot = int(sum(nvec))
    R = B * T

    # Lane-packing factor: pack G rows of width H into one 128-lane output row.
    G = (128 // H) if (H <= 128 and 128 % H == 0) else 1
    # Guard the kron blow-up (table is G^2 x the fused table, flops are G x minimal).
    if G > 1 and n_tot > 512:
        G = 1

    # ---- offline fusion: F_i = E_i @ W_i^T, concatenated, bias folded in ----
    fused = [
        emb_tables[i].astype(jnp.float32)
        @ weight[:, i * H:(i + 1) * H].T.astype(jnp.float32)
        for i in range(L)
    ]
    fcat = jnp.concatenate(fused, axis=0)                       # (n_tot, H)
    # Pad so K = G*n_pad is a multiple of 128; reserve one padded row for the bias.
    n_pad = _round_up(n_tot + 1, 128 // G)
    fcat = jnp.pad(fcat, ((0, n_pad - n_tot), (0, 0)))
    fcat = fcat.at[n_tot].set(bias.astype(jnp.float32))         # bias as row n_tot
    # Block-diagonal table: G consecutive rows land in disjoint H-lane slots.
    tbl = jnp.kron(jnp.eye(G, dtype=jnp.float32), fcat).astype(jnp.bfloat16)  # (K, G*H)
    K = G * n_pad
    GH = G * H

    # ---- id preprocessing: component offsets + bias column + slot offsets ----
    offsets = np.concatenate([[0], np.cumsum(nvec)[:-1]]).astype(np.int32)
    gids = actions.reshape(R, L).astype(jnp.int32) + jnp.asarray(offsets)[None, :]
    bias_col = jnp.full((R, 1), n_tot, jnp.int32)                # always-match bias row
    gids = jnp.concatenate([gids, bias_col], axis=-1)            # (R, L+1)
    L1 = L + 1

    # ---- tile sizing from VMEM budget (cols block lane-pads to >=128 lanes) ----
    out_bytes = jnp.dtype(out_dtype).itemsize
    cols_lanes = _round_up(G * L1, 128)
    tbl_bytes = K * GH * 2                                       # bf16, single-buffered

    def vmem_per_tile(t):
        return (2 * t * cols_lanes * 4        # cols double-buffer (lane-padded int32)
                + 2 * t * GH * out_bytes      # output double-buffer
                + tbl_bytes)                  # resident fused table

    try:
        info = pltpu.get_tpu_info()
        vmem_cap = int(getattr(info, "vmem_capacity_bytes", 64 * 1024 * 1024))
    except Exception:
        vmem_cap = 64 * 1024 * 1024           # conservative (v7x per-core VMEM)
    vmem_budget = vmem_cap // 2               # headroom for Mosaic internals

    Rg = pl.cdiv(R, G)                        # grouped row count (pre-pad)
    trg = _round_up(min(tile_rows, max(Rg, 8)), 8)
    while trg > 8 and vmem_per_tile(trg) > vmem_budget:
        trg = _round_up(trg // 2, 8)
    # Keep >= ~4 grid steps when there is enough work so v7x's 2 TCs both get tiles.
    if Rg > 32:
        trg = min(trg, _round_up(pl.cdiv(Rg, 4), 8))
    trg = max(trg, 8)

    Rg_pad = _round_up(Rg, trg)
    Rp = Rg_pad * G
    vmem_limit = int(min(max(2 * vmem_per_tile(trg), 32 * 1024 * 1024), vmem_cap))

    # ---- build column-index tensor (padded rows never match any column) ----
    pad_val = jnp.int32(-(1 << 20))
    gids_full = jnp.full((Rp, L1), pad_val, jnp.int32).at[:R].set(gids)
    slot_off = (jnp.arange(G, dtype=jnp.int32) * n_pad)[None, :, None]
    cols = (gids_full.reshape(Rg_pad, G, L1) + slot_off).reshape(Rg_pad, G * L1)

    grid = (Rg_pad // trg,)
    kernel = _make_kernel(G * L1)

    def run(table_spec):
        return pl.pallas_call(
            kernel,
            out_shape=jax.ShapeDtypeStruct((Rg_pad, GH), out_dtype),
            grid=grid,
            in_specs=[
                pl.BlockSpec((trg, G * L1), lambda r: (r, 0)),   # ids (pipelined)
                table_spec,                                      # fused table (resident)
            ],
            out_specs=pl.BlockSpec((trg, GH), lambda r: (r, 0)),  # lane-dense output
            compiler_params=pltpu.CompilerParams(
                dimension_semantics=("parallel",),
                vmem_limit_bytes=vmem_limit,
            ),
            cost_estimate=pl.CostEstimate(
                flops=2 * Rg_pad * K * GH,
                transcendentals=0,
                bytes_accessed=int(cols.size * 4 + tbl.size * 2
                                   + Rg_pad * GH * out_bytes),
            ),
        )(cols, tbl)

    try:
        # Resident table with constant index_map: single-buffer it (frees VMEM on v7x).
        out2d = run(pl.BlockSpec((K, GH), lambda r: (0, 0),
                                 pipeline_mode=pl.Buffered(1)))
    except Exception:
        out2d = run(pl.BlockSpec((K, GH), lambda r: (0, 0)))

    # The (Rg_pad, G*H) -> (Rp, H) reshape is a pure row-major split (slot g of grouped
    # row r is original row r*G+g), so for row-major consumers it is a bitcast + slice,
    # not a (·,128)->(·,32) relayout pass.
    # TODO(synk): if a downstream Pallas consumer exists, hand it the packed
    #             (Rg_pad, 128) layout directly and unpack inside that kernel.
    return out2d.reshape(Rp, H)[:R].reshape(B, T, H)


def _reference(actions, emb_tables, weight, bias):
    """Pure-JAX f32 reference matching the PyTorch forward."""
    B, T, L = actions.shape
    xs = [emb_tables[i][actions[..., i]] for i in range(L)]      # each (B, T, H)
    x = jnp.concatenate(xs, axis=-1)                             # (B, T, L*H)
    return x @ weight.T + bias                                   # (B, T, H)


def _reference_bf16_tables(actions, emb_tables, weight, bias):
    """Reference with the same bf16 quantization of fused tables + bias as the kernel."""
    B, T, L = actions.shape
    H = weight.shape[0]
    fused = [
        (emb_tables[i].astype(jnp.float32)
         @ weight[:, i * H:(i + 1) * H].T).astype(jnp.bfloat16).astype(jnp.float32)
        for i in range(L)
    ]
    out = sum(fused[i][actions[..., i]] for i in range(L))
    return out + bias.astype(jnp.bfloat16).astype(jnp.float32)


if __name__ == "__main__":
    # Small deterministic configuration.
    B, T, H = 2, 8, 32
    nvec = (6, 8, 4)                    # MultiDiscrete action space
    L = len(nvec)

    key = jax.random.PRNGKey(0)
    k_act, k_w, k_b, *k_embs = jax.random.split(key, 4 + L)

    # Deterministic synthetic parameters (shapes match nn.Embedding / nn.Linear).
    emb_tables = [
        jax.random.normal(k_embs[i], (nvec[i], H), dtype=jnp.float32)
        for i in range(L)
    ]
    weight = jax.random.normal(k_w, (H, L * H), dtype=jnp.float32) * (1.0 / (L * H) ** 0.5)
    bias = jax.random.normal(k_b, (H,), dtype=jnp.float32) * 0.01

    # Integer actions, each component in [0, nvec_i).
    cols = [
        jax.random.randint(jax.random.fold_in(k_act, i), (B, T, 1), 0, nvec[i])
        for i in range(L)
    ]
    actions = jnp.concatenate(cols, axis=-1).astype(jnp.int32)   # (B, T, L)

    out = act_embedding_multidiscrete(actions, emb_tables, weight, bias)
    out = jax.block_until_ready(out)
    assert out.shape == (B, T, H)

    # Tight check vs a reference using the same bf16-quantized fused tables + bias.
    ref_q = _reference_bf16_tables(actions, emb_tables, weight, bias)
    assert jnp.allclose(out, ref_q, atol=1e-4, rtol=1e-4), "mismatch vs bf16-quantized reference"

    # Looser check vs the full-f32 PyTorch-equivalent reference (bf16 table rounding).
    ref = _reference(actions, emb_tables, weight, bias)
    assert jnp.allclose(out, ref, atol=5e-2, rtol=5e-2), "mismatch vs f32 reference"

    # bf16-output variant (halves output writeback; v5e benefits most).
    out_bf16 = act_embedding_multidiscrete(actions, emb_tables, weight, bias,
                                           out_dtype=jnp.bfloat16)
    out_bf16 = jax.block_until_ready(out_bf16)
    assert out_bf16.shape == (B, T, H)
    assert jnp.allclose(out_bf16.astype(jnp.float32), ref, atol=5e-2, rtol=5e-2), \
        "mismatch vs f32 reference (bf16 output)"

    print("KERNEL_OK")
</pallas_src>

<mosaic_0001>
module attributes {stable_mosaic.version = 11 : i64} {
  func.func @kernel(%arg0: i32, %arg1: memref<8x16xi32, #tpu.memory_space<vmem>>, %arg2: memref<128x128xbf16, #tpu.memory_space<vmem>>, %arg3: memref<8x128xf32, #tpu.memory_space<vmem>>) attributes {dimension_semantics = [#tpu.dimension_semantics<parallel>], iteration_bounds = array<i64: 1>, scalar_prefetch = 0 : i64, scratch_operands = 0 : i64, tpu.core_type = #tpu.core_type<tc>, window_params = [{transform_indices = @transform_0, window_bounds = array<i64: 8, 16>}, {pipeline_mode = #tpu.pipeline_mode<synchronous>, transform_indices = @transform_1, window_bounds = array<i64: 128, 128>}, {transform_indices = @transform_2, window_bounds = array<i64: 8, 128>}]} {
    %c0 = arith.constant 0 : index
    %c0_0 = arith.constant 0 : index
    %0 = vector.load %arg1[%c0, %c0_0] : memref<8x16xi32, #tpu.memory_space<vmem>>, vector<8x16xi32>
    %1 = tpu.iota {dimensions = array<i32: 1>} : vector<8x128xi32>
    %2 = vector.extract_strided_slice %0 {offsets = [0, 0], sizes = [8, 1], strides = [1, 1]} : vector<8x16xi32> to vector<8x1xi32>
    %3 = vector.broadcast %2 : vector<8x1xi32> to vector<8x128xi32>
    %4 = arith.cmpi eq, %1, %3 : vector<8x128xi32>
    %5 = vector.extract_strided_slice %0 {offsets = [0, 1], sizes = [8, 1], strides = [1, 1]} : vector<8x16xi32> to vector<8x1xi32>
    %6 = vector.broadcast %5 : vector<8x1xi32> to vector<8x128xi32>
    %7 = arith.cmpi eq, %1, %6 : vector<8x128xi32>
    %8 = arith.ori %4, %7 : vector<8x128xi1>
    %9 = vector.extract_strided_slice %0 {offsets = [0, 2], sizes = [8, 1], strides = [1, 1]} : vector<8x16xi32> to vector<8x1xi32>
    %10 = vector.broadcast %9 : vector<8x1xi32> to vector<8x128xi32>
    %11 = arith.cmpi eq, %1, %10 : vector<8x128xi32>
    %12 = arith.ori %8, %11 : vector<8x128xi1>
    %13 = vector.extract_strided_slice %0 {offsets = [0, 3], sizes = [8, 1], strides = [1, 1]} : vector<8x16xi32> to vector<8x1xi32>
    %14 = vector.broadcast %13 : vector<8x1xi32> to vector<8x128xi32>
    %15 = arith.cmpi eq, %1, %14 : vector<8x128xi32>
    %16 = arith.ori %12, %15 : vector<8x128xi1>
    %17 = vector.extract_strided_slice %0 {offsets = [0, 4], sizes = [8, 1], strides = [1, 1]} : vector<8x16xi32> to vector<8x1xi32>
    %18 = vector.broadcast %17 : vector<8x1xi32> to vector<8x128xi32>
    %19 = arith.cmpi eq, %1, %18 : vector<8x128xi32>
    %20 = arith.ori %16, %19 : vector<8x128xi1>
    %21 = vector.extract_strided_slice %0 {offsets = [0, 5], sizes = [8, 1], strides = [1, 1]} : vector<8x16xi32> to vector<8x1xi32>
    %22 = vector.broadcast %21 : vector<8x1xi32> to vector<8x128xi32>
    %23 = arith.cmpi eq, %1, %22 : vector<8x128xi32>
    %24 = arith.ori %20, %23 : vector<8x128xi1>
    %25 = vector.extract_strided_slice %0 {offsets = [0, 6], sizes = [8, 1], strides = [1, 1]} : vector<8x16xi32> to vector<8x1xi32>
    %26 = vector.broadcast %25 : vector<8x1xi32> to vector<8x128xi32>
    %27 = arith.cmpi eq, %1, %26 : vector<8x128xi32>
    %28 = arith.ori %24, %27 : vector<8x128xi1>
    %29 = vector.extract_strided_slice %0 {offsets = [0, 7], sizes = [8, 1], strides = [1, 1]} : vector<8x16xi32> to vector<8x1xi32>
    %30 = vector.broadcast %29 : vector<8x1xi32> to vector<8x128xi32>
    %31 = arith.cmpi eq, %1, %30 : vector<8x128xi32>
    %32 = arith.ori %28, %31 : vector<8x128xi1>
    %33 = vector.extract_strided_slice %0 {offsets = [0, 8], sizes = [8, 1], strides = [1, 1]} : vector<8x16xi32> to vector<8x1xi32>
    %34 = vector.broadcast %33 : vector<8x1xi32> to vector<8x128xi32>
    %35 = arith.cmpi eq, %1, %34 : vector<8x128xi32>
    %36 = arith.ori %32, %35 : vector<8x128xi1>
    %37 = vector.extract_strided_slice %0 {offsets = [0, 9], sizes = [8, 1], strides = [1, 1]} : vector<8x16xi32> to vector<8x1xi32>
    %38 = vector.broadcast %37 : vector<8x1xi32> to vector<8x128xi32>
    %39 = arith.cmpi eq, %1, %38 : vector<8x128xi32>
    %40 = arith.ori %36, %39 : vector<8x128xi1>
    %41 = vector.extract_strided_slice %0 {offsets = [0, 10], sizes = [8, 1], strides = [1, 1]} : vector<8x16xi32> to vector<8x1xi32>
    %42 = vector.broadcast %41 : vector<8x1xi32> to vector<8x128xi32>
    %43 = arith.cmpi eq, %1, %42 : vector<8x128xi32>
    %44 = arith.ori %40, %43 : vector<8x128xi1>
    %45 = vector.extract_strided_slice %0 {offsets = [0, 11], sizes = [8, 1], strides = [1, 1]} : vector<8x16xi32> to vector<8x1xi32>
    %46 = vector.broadcast %45 : vector<8x1xi32> to vector<8x128xi32>
    %47 = arith.cmpi eq, %1, %46 : vector<8x128xi32>
    %48 = arith.ori %44, %47 : vector<8x128xi1>
    %49 = vector.extract_strided_slice %0 {offsets = [0, 12], sizes = [8, 1], strides = [1, 1]} : vector<8x16xi32> to vector<8x1xi32>
    %50 = vector.broadcast %49 : vector<8x1xi32> to vector<8x128xi32>
    %51 = arith.cmpi eq, %1, %50 : vector<8x128xi32>
    %52 = arith.ori %48, %51 : vector<8x128xi1>
    %53 = vector.extract_strided_slice %0 {offsets = [0, 13], sizes = [8, 1], strides = [1, 1]} : vector<8x16xi32> to vector<8x1xi32>
    %54 = vector.broadcast %53 : vector<8x1xi32> to vector<8x128xi32>
    %55 = arith.cmpi eq, %1, %54 : vector<8x128xi32>
    %56 = arith.ori %52, %55 : vector<8x128xi1>
    %57 = vector.extract_strided_slice %0 {offsets = [0, 14], sizes = [8, 1], strides = [1, 1]} : vector<8x16xi32> to vector<8x1xi32>
    %58 = vector.broadcast %57 : vector<8x1xi32> to vector<8x128xi32>
    %59 = arith.cmpi eq, %1, %58 : vector<8x128xi32>
    %60 = arith.ori %56, %59 : vector<8x128xi1>
    %61 = vector.extract_strided_slice %0 {offsets = [0, 15], sizes = [8, 1], strides = [1, 1]} : vector<8x16xi32> to vector<8x1xi32>
    %62 = vector.broadcast %61 : vector<8x1xi32> to vector<8x128xi32>
    %63 = arith.cmpi eq, %1, %62 : vector<8x128xi32>
    %64 = arith.ori %60, %63 : vector<8x128xi1>
    %65 = arith.extui %64 : vector<8x128xi1> to vector<8x128xi32>
    %66 = arith.sitofp %65 : vector<8x128xi32> to vector<8x128xf32>
    %67 = arith.truncf %66 : vector<8x128xf32> to vector<8x128xbf16>
    %c0_1 = arith.constant 0 : index
    %c0_2 = arith.constant 0 : index
    %68 = vector.load %arg2[%c0_1, %c0_2] : memref<128x128xbf16, #tpu.memory_space<vmem>>, vector<128x128xbf16>
    %cst = arith.constant dense<0.000000e+00> : vector<8x128xf32>
    %69 = tpu.matmul %67, %68, %cst {dimension_numbers = #tpu.dot_dimension_numbers<[1], [0], [0], [1], [0, 0, 1, 1], [], []>} : vector<8x128xbf16>, vector<128x128xbf16>, vector<8x128xf32> -> vector<8x128xf32>
    %c0_3 = arith.constant 0 : index
    %c0_4 = arith.constant 0 : index
    %70 = vector.load %arg3[%c0_3, %c0_4] : memref<8x128xf32, #tpu.memory_space<vmem>>, vector<8x128xf32>
    tpu.vector_store %arg3[%c0_3, %c0_4], %69 {strides = array<i32>} : memref<8x128xf32, #tpu.memory_space<vmem>>, vector<8x128xf32>,
    return
  }
  func.func @transform_0(%arg0: i32) -> (i32, i32) {
    %c0_i32 = arith.constant 0 : i32
    %c0_i32_0 = arith.constant 0 : i32
    return %arg0, %c0_i32 : i32, i32
  }
  func.func @transform_1(%arg0: i32) -> (i32, i32) {
    %c0_i32 = arith.constant 0 : i32
    %c0_i32_0 = arith.constant 0 : i32
    %c0_i32_1 = arith.constant 0 : i32
    return %c0_i32, %c0_i32_0 : i32, i32
  }
  func.func @transform_2(%arg0: i32) -> (i32, i32) {
    %c0_i32 = arith.constant 0 : i32
    %c0_i32_0 = arith.constant 0 : i32
    return %arg0, %c0_i32 : i32, i32
  }
}

module attributes {stable_mosaic.version = 11 : i64} {
  func.func @kernel(%arg0: i32, %arg1: memref<8x16xi32, #tpu.memory_space<vmem>>, %arg2: memref<128x128xbf16, #tpu.memory_space<vmem>>, %arg3: memref<8x128xf32, #tpu.memory_space<vmem>>) attributes {dimension_semantics = [#tpu.dimension_semantics<parallel>], iteration_bounds = array<i64: 1>, scalar_prefetch = 0 : i64, scratch_operands = 0 : i64, tpu.core_type = #tpu.core_type<tc>, window_params = [{transform_indices = @transform_0, window_bounds = array<i64: 8, 16>}, {pipeline_mode = #tpu.pipeline_mode<synchronous>, transform_indices = @transform_1, window_bounds = array<i64: 128, 128>}, {transform_indices = @transform_2, window_bounds = array<i64: 8, 128>}]} {
    %c0 = arith.constant 0 : index
    %c0_0 = arith.constant 0 : index
    %0 = vector.load %arg1[%c0, %c0_0] : memref<8x16xi32, #tpu.memory_space<vmem>>, vector<8x16xi32>
    %1 = tpu.iota {dimensions = array<i32: 1>} : vector<8x128xi32>
    %2 = vector.extract_strided_slice %0 {offsets = [0, 0], sizes = [8, 1], strides = [1, 1]} : vector<8x16xi32> to vector<8x1xi32>
    %3 = vector.broadcast %2 : vector<8x1xi32> to vector<8x128xi32>
    %4 = arith.cmpi eq, %1, %3 : vector<8x128xi32>
    %5 = vector.extract_strided_slice %0 {offsets = [0, 1], sizes = [8, 1], strides = [1, 1]} : vector<8x16xi32> to vector<8x1xi32>
    %6 = vector.broadcast %5 : vector<8x1xi32> to vector<8x128xi32>
    %7 = arith.cmpi eq, %1, %6 : vector<8x128xi32>
    %8 = arith.ori %4, %7 : vector<8x128xi1>
    %9 = vector.extract_strided_slice %0 {offsets = [0, 2], sizes = [8, 1], strides = [1, 1]} : vector<8x16xi32> to vector<8x1xi32>
    %10 = vector.broadcast %9 : vector<8x1xi32> to vector<8x128xi32>
    %11 = arith.cmpi eq, %1, %10 : vector<8x128xi32>
    %12 = arith.ori %8, %11 : vector<8x128xi1>
    %13 = vector.extract_strided_slice %0 {offsets = [0, 3], sizes = [8, 1], strides = [1, 1]} : vector<8x16xi32> to vector<8x1xi32>
    %14 = vector.broadcast %13 : vector<8x1xi32> to vector<8x128xi32>
    %15 = arith.cmpi eq, %1, %14 : vector<8x128xi32>
    %16 = arith.ori %12, %15 : vector<8x128xi1>
    %17 = vector.extract_strided_slice %0 {offsets = [0, 4], sizes = [8, 1], strides = [1, 1]} : vector<8x16xi32> to vector<8x1xi32>
    %18 = vector.broadcast %17 : vector<8x1xi32> to vector<8x128xi32>
    %19 = arith.cmpi eq, %1, %18 : vector<8x128xi32>
    %20 = arith.ori %16, %19 : vector<8x128xi1>
    %21 = vector.extract_strided_slice %0 {offsets = [0, 5], sizes = [8, 1], strides = [1, 1]} : vector<8x16xi32> to vector<8x1xi32>
    %22 = vector.broadcast %21 : vector<8x1xi32> to vector<8x128xi32>
    %23 = arith.cmpi eq, %1, %22 : vector<8x128xi32>
    %24 = arith.ori %20, %23 : vector<8x128xi1>
    %25 = vector.extract_strided_slice %0 {offsets = [0, 6], sizes = [8, 1], strides = [1, 1]} : vector<8x16xi32> to vector<8x1xi32>
    %26 = vector.broadcast %25 : vector<8x1xi32> to vector<8x128xi32>
    %27 = arith.cmpi eq, %1, %26 : vector<8x128xi32>
    %28 = arith.ori %24, %27 : vector<8x128xi1>
    %29 = vector.extract_strided_slice %0 {offsets = [0, 7], sizes = [8, 1], strides = [1, 1]} : vector<8x16xi32> to vector<8x1xi32>
    %30 = vector.broadcast %29 : vector<8x1xi32> to vector<8x128xi32>
    %31 = arith.cmpi eq, %1, %30 : vector<8x128xi32>
    %32 = arith.ori %28, %31 : vector<8x128xi1>
    %33 = vector.extract_strided_slice %0 {offsets = [0, 8], sizes = [8, 1], strides = [1, 1]} : vector<8x16xi32> to vector<8x1xi32>
    %34 = vector.broadcast %33 : vector<8x1xi32> to vector<8x128xi32>
    %35 = arith.cmpi eq, %1, %34 : vector<8x128xi32>
    %36 = arith.ori %32, %35 : vector<8x128xi1>
    %37 = vector.extract_strided_slice %0 {offsets = [0, 9], sizes = [8, 1], strides = [1, 1]} : vector<8x16xi32> to vector<8x1xi32>
    %38 = vector.broadcast %37 : vector<8x1xi32> to vector<8x128xi32>
    %39 = arith.cmpi eq, %1, %38 : vector<8x128xi32>
    %40 = arith.ori %36, %39 : vector<8x128xi1>
    %41 = vector.extract_strided_slice %0 {offsets = [0, 10], sizes = [8, 1], strides = [1, 1]} : vector<8x16xi32> to vector<8x1xi32>
    %42 = vector.broadcast %41 : vector<8x1xi32> to vector<8x128xi32>
    %43 = arith.cmpi eq, %1, %42 : vector<8x128xi32>
    %44 = arith.ori %40, %43 : vector<8x128xi1>
    %45 = vector.extract_strided_slice %0 {offsets = [0, 11], sizes = [8, 1], strides = [1, 1]} : vector<8x16xi32> to vector<8x1xi32>
    %46 = vector.broadcast %45 : vector<8x1xi32> to vector<8x128xi32>
    %47 = arith.cmpi eq, %1, %46 : vector<8x128xi32>
    %48 = arith.ori %44, %47 : vector<8x128xi1>
    %49 = vector.extract_strided_slice %0 {offsets = [0, 12], sizes = [8, 1], strides = [1, 1]} : vector<8x16xi32> to vector<8x1xi32>
    %50 = vector.broadcast %49 : vector<8x1xi32> to vector<8x128xi32>
    %51 = arith.cmpi eq, %1, %50 : vector<8x128xi32>
    %52 = arith.ori %48, %51 : vector<8x128xi1>
    %53 = vector.extract_strided_slice %0 {offsets = [0, 13], sizes = [8, 1], strides = [1, 1]} : vector<8x16xi32> to vector<8x1xi32>
    %54 = vector.broadcast %53 : vector<8x1xi32> to vector<8x128xi32>
    %55 = arith.cmpi eq, %1, %54 : vector<8x128xi32>
    %56 = arith.ori %52, %55 : vector<8x128xi1>
    %57 = vector.extract_strided_slice %0 {offsets = [0, 14], sizes = [8, 1], strides = [1, 1]} : vector<8x16xi32> to vector<8x1xi32>
    %58 = vector.broadcast %57 : vector<8x1xi32> to vector<8x128xi32>
    %59 = arith.cmpi eq, %1, %58 : vector<8x128xi32>
    %60 = arith.ori %56, %59 : vector<8x128xi1>
    %61 = vector.extract_strided_slice %0 {offsets = [0, 15], sizes = [8, 1], strides = [1, 1]} : vector<8x16xi32> to vector<8x1xi32>
    %62 = vector.broadcast %61 : vector<8x1xi32> to vector<8x128xi32>
    %63 = arith.cmpi eq, %1, %62 : vector<8x128xi32>
    %64 = arith.ori %60, %63 : vector<8x128xi1>
    %65 = arith.extui %64 : vector<8x128xi1> to vector<8x128xi32>
    %66 = arith.sitofp %65 : vector<8x128xi32> to vector<8x128xf32>
    %67 = arith.truncf %66 : vector<8x128xf32> to vector<8x128xbf16>
    %c0_1 = arith.constant 0 : index
    %c0_2 = arith.constant 0 : index
    %68 = vector.load %arg2[%c0_1, %c0_2] : memref<128x128xbf16, #tpu.memory_space<vmem>>, vector<128x128xbf16>
    %cst = arith.constant dense<0.000000e+00> : vector<8x128xf32>
    %69 = tpu.matmul %67, %68, %cst {dimension_numbers = #tpu.dot_dimension_numbers<[1], [0], [0], [1], [0, 0, 1, 1], [], []>} : vector<8x128xbf16>, vector<128x128xbf16>, vector<8x128xf32> -> vector<8x128xf32>
    %c0_3 = arith.constant 0 : index
    %c0_4 = arith.constant 0 : index
    %70 = vector.load %arg3[%c0_3, %c0_4] : memref<8x128xf32, #tpu.memory_space<vmem>>, vector<8x128xf32>
    tpu.vector_store %arg3[%c0_3, %c0_4], %69 {strides = array<i32>} : memref<8x128xf32, #tpu.memory_space<vmem>>, vector<8x128xf32>,
    return
  }
  func.func @transform_0(%arg0: i32) -> (i32, i32) {
    %c0_i32 = arith.constant 0 : i32
    %c0_i32_0 = arith.constant 0 : i32
    return %arg0, %c0_i32 : i32, i32
  }
  func.func @transform_1(%arg0: i32) -> (i32, i32) {
    %c0_i32 = arith.constant 0 : i32
    %c0_i32_0 = arith.constant 0 : i32
    %c0_i32_1 = arith.constant 0 : i32
    return %c0_i32, %c0_i32_0 : i32, i32
  }
  func.func @transform_2(%arg0: i32) -> (i32, i32) {
    %c0_i32 = arith.constant 0 : i32
    %c0_i32_0 = arith.constant 0 : i32
    return %arg0, %c0_i32 : i32, i32
  }
}

</mosaic_0001>

<llo_original>
// kernel: tpu_custom_call.1
$region0: #{tpu_custom_call.1}
  #allocation0 [shape = 'u32[]', space=smem, size = 0x4, offset = 0x4, fixed_abs, tag = 'smem constant byte address 0x4 - core index']
  #allocation1 [shape = 'u32[144,128]{1,0:T(1,128)}', space=vmem, size = 0x12000, scoped, tag = 'internal scratch']
  %s0 = inlined_call_operand.hbm [shape: s32[8,16], index: 0, kind: input, shape index: {}]
  %s1 = inlined_call_operand.hbm [shape: bf16[128,128], index: 1, kind: input, shape index: {}]
  %s2 = inlined_call_operand.hbm [shape: f32[8,128], index: 2, kind: output, shape index: {}]
  %s3 = sld [smem:[#allocation0]]
  $region26: #{tpu_custom_call.1} parent=0
    _
  %s5 = ssub.s32 1, %s3
  %s6 = scalar_select 0, %s5, %s3
  $region1: #{tpu_custom_call.1} parent=0
    #allocation2 [shape = 'u8[4096]{0}', space=vmem, size = 0x1000, scoped, tag = 'input window, operand 0, single buffered']
    #allocation3 [shape = 's32[1]{0}', space=sflag, size = 0x4, scoped, tag = 'scoped memory for tpu_custom_call.1']
    #allocation4 [shape = 's32[1]{0}', space=sflag, size = 0x4, scoped, tag = 'scoped memory for tpu_custom_call.1']
    #allocation5 [shape = 'u8[32768]{0}', space=vmem, size = 0x8000, scoped, tag = 'input window, operand 1, single buffered']
    #allocation6 [shape = 's32[1]{0}', space=sflag, size = 0x4, scoped, tag = 'scoped memory for tpu_custom_call.1']
    #allocation7 [shape = 'u8[4096]{0}', space=vmem, size = 0x1000, scoped, tag = 'output window, operand 0, single buffered']
    %7 = vsyncpa [#allocation3], 0
    %8 = vsyncpa [#allocation6], 0
    %9 = vsyncpa [#allocation4], 0
    // Predicated region
    $region2: #{tpu_custom_call.1} parent=1 // pred_check
      _
    $region3: #{tpu_custom_call.1} parent=1 // pred_check_branch
      %11 = sbr.rel (0) target = $region5
    $region4: #{tpu_custom_call.1} parent=1 // pred_region
      %s13 = ssub.s32 128, 128
      %14 = vsyncadd [#allocation3], %s13
      %s16 = sshll.u32 [#allocation2], 4
      %s17 = int_to_ptr.vmem [resolvable:$true] %s16
      %19 = dma.hbm_to_vmem [thread:$0]  %s0, 128, %s17, [#allocation3]
    $region5: #{tpu_custom_call.1} parent=1 // pred_fallthru
      _
    // Predicated region
    $region6: #{tpu_custom_call.1} parent=1 // pred_check
      _
    $region7: #{tpu_custom_call.1} parent=1 // pred_check_branch
      %21 = sbr.rel (0) target = $region9
    $region8: #{tpu_custom_call.1} parent=1 // pred_region
      %s23 = ssub.s32 1024, 1024
      %24 = vsyncadd [#allocation6], %s23
      %s25 = sshll.u32 [#allocation5], 4
      %s26 = int_to_ptr.vmem [resolvable:$true] %s25
      %31 = dma.hbm_to_vmem [thread:$0]  %s1, 1024, %s26, [#allocation6], 64, 64, 4
    $region9: #{tpu_custom_call.1} parent=1 // pred_fallthru
      _
    // Predicated region
    $region10: #{tpu_custom_call.1} parent=1 // pred_check
      _
    $region11: #{tpu_custom_call.1} parent=1 // pred_check_branch
      %33 = sbr.rel (0) target = $region13
    $region12: #{tpu_custom_call.1} parent=1 // pred_region
      %34 = dma.done [#allocation3], 128
    $region13: #{tpu_custom_call.1} parent=1 // pred_fallthru
      _
    // Predicated region
    $region14: #{tpu_custom_call.1} parent=1 // pred_check
      _
    $region15: #{tpu_custom_call.1} parent=1 // pred_check_branch
      %36 = sbr.rel (0) target = $region17
    $region16: #{tpu_custom_call.1} parent=1 // pred_region
      %37 = dma.done [#allocation6], 1024
    $region17: #{tpu_custom_call.1} parent=1 // pred_fallthru
      _
    %v39 = vld [vmem:[#allocation2] sm:$0xff]
    %v40 = vlaneseq
    %v41 = vand.u32 %v40, 127
    %42 = vset.pattern.permute.xlu0 0
    %43 = vperm.xlu0 %42, %v39
    %v44 = vpop.permute.xlu0 %43
    %vm45 = vcmp.eq.s32.totalorder %v41, %v44
    %46 = vset.pattern.permute.xlu0 1
    %47 = vperm.xlu0 %46, %v39
    %v48 = vpop.permute.xlu0 %47
    %vm49 = vcmp.eq.s32.totalorder %v41, %v48
    %vm50 = vmor %vm45, %vm49
    %51 = vset.pattern.permute.xlu0 2
    %52 = vperm.xlu0 %51, %v39
    %v53 = vpop.permute.xlu0 %52
    %vm54 = vcmp.eq.s32.totalorder %v41, %v53
    %vm55 = vmor %vm50, %vm54
    %56 = vset.pattern.permute.xlu0 3
    %57 = vperm.xlu0 %56, %v39
    %v58 = vpop.permute.xlu0 %57
    %vm59 = vcmp.eq.s32.totalorder %v41, %v58
    %vm60 = vmor %vm55, %vm59
    %61 = vset.pattern.permute.xlu0 4
    %62 = vperm.xlu0 %61, %v39
    %v63 = vpop.permute.xlu0 %62
    %vm64 = vcmp.eq.s32.totalorder %v41, %v63
    %vm65 = vmor %vm60, %vm64
    %66 = vset.pattern.permute.xlu0 5
    %67 = vperm.xlu0 %66, %v39
    %v68 = vpop.permute.xlu0 %67
    %vm69 = vcmp.eq.s32.totalorder %v41, %v68
    %vm70 = vmor %vm65, %vm69
    %71 = vset.pattern.permute.xlu0 6
    %72 = vperm.xlu0 %71, %v39
    %v73 = vpop.permute.xlu0 %72
    %vm74 = vcmp.eq.s32.totalorder %v41, %v73
    %vm75 = vmor %vm70, %vm74
    %76 = vset.pattern.permute.xlu0 7
    %77 = vperm.xlu0 %76, %v39
    %v78 = vpop.permute.xlu0 %77
    %vm79 = vcmp.eq.s32.totalorder %v41, %v78
    %vm80 = vmor %vm75, %vm79
    %81 = vset.pattern.permute.xlu0 8
    %82 = vperm.xlu0 %81, %v39
    %v83 = vpop.permute.xlu0 %82
    %vm84 = vcmp.eq.s32.totalorder %v41, %v83
    %vm85 = vmor %vm80, %vm84
    %86 = vset.pattern.permute.xlu0 9
    %87 = vperm.xlu0 %86, %v39
    %v88 = vpop.permute.xlu0 %87
    %vm89 = vcmp.eq.s32.totalorder %v41, %v88
    %vm90 = vmor %vm85, %vm89
    %91 = vset.pattern.permute.xlu0 10
    %92 = vperm.xlu0 %91, %v39
    %v93 = vpop.permute.xlu0 %92
    %vm94 = vcmp.eq.s32.totalorder %v41, %v93
    %vm95 = vmor %vm90, %vm94
    %96 = vset.pattern.permute.xlu0 11
    %97 = vperm.xlu0 %96, %v39
    %v98 = vpop.permute.xlu0 %97
    %vm99 = vcmp.eq.s32.totalorder %v41, %v98
    %vm100 = vmor %vm95, %vm99
    %101 = vset.pattern.permute.xlu0 12
    %102 = vperm.xlu0 %101, %v39
    %v103 = vpop.permute.xlu0 %102
    %vm104 = vcmp.eq.s32.totalorder %v41, %v103
    %vm105 = vmor %vm100, %vm104
    %106 = vset.pattern.permute.xlu0 13
    %107 = vperm.xlu0 %106, %v39
    %v108 = vpop.permute.xlu0 %107
    %vm109 = vcmp.eq.s32.totalorder %v41, %v108
    %vm110 = vmor %vm105, %vm109
    %111 = vset.pattern.permute.xlu0 14
    %112 = vperm.xlu0 %111, %v39
    %v113 = vpop.permute.xlu0 %112
    %vm114 = vcmp.eq.s32.totalorder %v41, %v113
    %vm115 = vmor %vm110, %vm114
    %116 = vset.pattern.permute.xlu0 15
    %117 = vperm.xlu0 %116, %v39
    %v118 = vpop.permute.xlu0 %117
    %vm119 = vcmp.eq.s32.totalorder %v41, %v118
    %vm120 = vmor %vm115, %vm119
    %v121 = vsel %vm120, 1, 0
    %v122 = vcvt.s32.f32 %v121
    %v123 = vpack.c.bf16 %v122, %v122
    %v124 = vld [vmem:[#allocation5] sm:$0xf]
    %v125 = vld [vmem:[#allocation5 + $0x4] sm:$0xf]
    %v126 = vld [vmem:[#allocation5 + $0x8] sm:$0xf]
    %v127 = vld [vmem:[#allocation5 + $0xc] sm:$0xf]
    %v128 = vld [vmem:[#allocation5 + $0x10] sm:$0xf]
    %v129 = vld [vmem:[#allocation5 + $0x14] sm:$0xf]
    %v130 = vld [vmem:[#allocation5 + $0x18] sm:$0xf]
    %v131 = vld [vmem:[#allocation5 + $0x1c] sm:$0xf]
    %v132 = vld [vmem:[#allocation5 + $0x20] sm:$0xf]
    %v133 = vld [vmem:[#allocation5 + $0x24] sm:$0xf]
    %v134 = vld [vmem:[#allocation5 + $0x28] sm:$0xf]
    %v135 = vld [vmem:[#allocation5 + $0x2c] sm:$0xf]
    %v136 = vld [vmem:[#allocation5 + $0x30] sm:$0xf]
    %v137 = vld [vmem:[#allocation5 + $0x34] sm:$0xf]
    %v138 = vld [vmem:[#allocation5 + $0x38] sm:$0xf]
    %v139 = vld [vmem:[#allocation5 + $0x3c] sm:$0xf]
    %v156 = vunpack.c.l.b16 %v124
    %v157 = vunpack.c.l.b16 %v125
    %v158 = vunpack.c.l.b16 %v126
    %v159 = vunpack.c.l.b16 %v127
    %v160 = vunpack.c.l.b16 %v128
    %v161 = vunpack.c.l.b16 %v129
    %v162 = vunpack.c.l.b16 %v130
    %v163 = vunpack.c.l.b16 %v131
    %v164 = vunpack.c.l.b16 %v132
    %v165 = vunpack.c.l.b16 %v133
    %v166 = vunpack.c.l.b16 %v134
    %v167 = vunpack.c.l.b16 %v135
    %v168 = vunpack.c.l.b16 %v136
    %v169 = vunpack.c.l.b16 %v137
    %v170 = vunpack.c.l.b16 %v138
    %v171 = vunpack.c.l.b16 %v139
    %v172 = vpack.c.b16 %v157, %v156
    %v173 = vpack.c.b16 %v159, %v158
    %v174 = vpack.c.b16 %v161, %v160
    %v175 = vpack.c.b16 %v163, %v162
    %v176 = vpack.c.b16 %v165, %v164
    %v177 = vpack.c.b16 %v167, %v166
    %v178 = vpack.c.b16 %v169, %v168
    %v179 = vpack.c.b16 %v171, %v170
    %188 = vmatprep.subr.bf16.mxu0 0
    %189 = vmatpush1.bf16.msra.mxu0 %v172
    %190 = vmatprep.subr.bf16.mxu0 0
    %191 = vmatpush1.bf16.msra.mxu0 %v173
    %192 = vmatprep.subr.bf16.mxu0 0
    %193 = vmatpush1.bf16.msra.mxu0 %v174
    %194 = vmatprep.subr.bf16.mxu0 0
    %195 = vmatpush1.bf16.msra.mxu0 %v175
    %196 = vmatprep.subr.bf16.mxu0 0
    %197 = vmatpush1.bf16.msra.mxu0 %v176
    %198 = vmatprep.subr.bf16.mxu0 0
    %199 = vmatpush1.bf16.msra.mxu0 %v177
    %200 = vmatprep.subr.bf16.mxu0 0
    %201 = vmatpush1.bf16.msra.mxu0 %v178
    %202 = vmatprep.subr.bf16.mxu0 0
    %203 = vmatpush1.bf16.msra.mxu0 %v179
    %204 = vmatprep.subr.bf16.mxu0 0
    %205 = vmatpush1.bf16.msra.mxu0 0
    %206 = vmatprep.subr.bf16.mxu0 0
    %207 = vmatpush1.bf16.msra.mxu0 0
    %208 = vmatprep.subr.bf16.mxu0 0
    %209 = vmatpush1.bf16.msra.mxu0 0
    %210 = vmatprep.subr.bf16.mxu0 0
    %211 = vmatpush1.bf16.msra.mxu0 0
    %212 = vmatprep.subr.bf16.mxu0 0
    %213 = vmatpush1.bf16.msra.mxu0 0
    %214 = vmatprep.subr.bf16.mxu0 0
    %215 = vmatpush1.bf16.msra.mxu0 0
    %216 = vmatprep.subr.bf16.mxu0 0
    %217 = vmatpush1.bf16.msra.mxu0 0
    %218 = vmatprep.subr.bf16.mxu0 0
    %219 = vmatpush1.bf16.msra.mxu0 0
    %220 = vmatprep.mubr.bf16.mxu0 0
    %221 = vmatmul.mubr.bf16.gmra.mrb[0].mxu0 %v123
    %v222 = vpop.f32.mrb[0].mxu0
    %v223 = vadd.f32 0.0, %v222
    %v224 = vpop.f32.mrb[0].mxu0
    %v225 = vpop.f32.mrb[0].mxu0
    %v226 = vpop.f32.mrb[0].mxu0
    %227 = vdwg.mxu0
    %228 = vst [vmem:[#allocation7] sm:$0xff] %v223
    // Predicated region
    $region18: #{tpu_custom_call.1} parent=1 // pred_check
      _
    $region19: #{tpu_custom_call.1} parent=1 // pred_check_branch
      %230 = sbr.rel (0) target = $region21
    $region20: #{tpu_custom_call.1} parent=1 // pred_region
      %s232 = ssub.s32 128, 128
      %233 = vsyncadd [#allocation4], %s232
      %s235 = sshll.u32 [#allocation7], 4
      %s236 = int_to_ptr.vmem [resolvable:$true] %s235
      %238 = dma.vmem_to_hbm [thread:$0]  %s236, 128, %s2, [#allocation4]
    $region21: #{tpu_custom_call.1} parent=1 // pred_fallthru
      _
    // Predicated region
    $region22: #{tpu_custom_call.1} parent=1 // pred_check
      _
    $region23: #{tpu_custom_call.1} parent=1 // pred_check_branch
      %240 = sbr.rel (0) target = $region25
    $region24: #{tpu_custom_call.1} parent=1 // pred_region
      %241 = dma.done [#allocation4], 128
    $region25: #{tpu_custom_call.1} parent=1 // pred_fallthru
      _
    %242 = vsyncpa [#allocation3], 1
    %243 = vsyncpa [#allocation6], 1
    %244 = vsyncpa [#allocation4], 1

// kernel: tpu_custom_call.1
$region0: #{tpu_custom_call.1}
  #allocation0 [shape = 'u32[]', space=smem, size = 0x4, offset = 0x4, fixed_abs, tag = 'smem constant byte address 0x4 - core index']
  #allocation1 [shape = 'u32[144,128]{1,0:T(1,128)}', space=vmem, size = 0x12000, scoped, tag = 'internal scratch']
  %s0 = inlined_call_operand.hbm [shape: s32[8,16], index: 0, kind: input, shape index: {}]
  %s1 = inlined_call_operand.hbm [shape: bf16[128,128], index: 1, kind: input, shape index: {}]
  %s2 = inlined_call_operand.hbm [shape: f32[8,128], index: 2, kind: output, shape index: {}]
  %s3 = sld [smem:[#allocation0]]
  $region26: #{tpu_custom_call.1} parent=0
    _
  %s5 = ssub.s32 1, %s3
  %s6 = scalar_select 0, %s5, %s3
  $region1: #{tpu_custom_call.1} parent=0
    #allocation2 [shape = 'u8[4096]{0}', space=vmem, size = 0x1000, scoped, tag = 'input window, operand 0, single buffered']
    #allocation3 [shape = 's32[1]{0}', space=sflag, size = 0x4, scoped, tag = 'scoped memory for tpu_custom_call.1']
    #allocation4 [shape = 's32[1]{0}', space=sflag, size = 0x4, scoped, tag = 'scoped memory for tpu_custom_call.1']
    #allocation5 [shape = 'u8[32768]{0}', space=vmem, size = 0x8000, scoped, tag = 'input window, operand 1, single buffered']
    #allocation6 [shape = 's32[1]{0}', space=sflag, size = 0x4, scoped, tag = 'scoped memory for tpu_custom_call.1']
    #allocation7 [shape = 'u8[4096]{0}', space=vmem, size = 0x1000, scoped, tag = 'output window, operand 0, single buffered']
    %7 = vsyncpa [#allocation3], 0
    %8 = vsyncpa [#allocation6], 0
    %9 = vsyncpa [#allocation4], 0
    // Predicated region
    $region2: #{tpu_custom_call.1} parent=1 // pred_check
      _
    $region3: #{tpu_custom_call.1} parent=1 // pred_check_branch
      %11 = sbr.rel (0) target = $region5
    $region4: #{tpu_custom_call.1} parent=1 // pred_region
      %s13 = ssub.s32 128, 128
      %14 = vsyncadd [#allocation3], %s13
      %s16 = sshll.u32 [#allocation2], 4
      %s17 = int_to_ptr.vmem [resolvable:$true] %s16
      %19 = dma.hbm_to_vmem [thread:$0]  %s0, 128, %s17, [#allocation3]
    $region5: #{tpu_custom_call.1} parent=1 // pred_fallthru
      _
    // Predicated region
    $region6: #{tpu_custom_call.1} parent=1 // pred_check
      _
    $region7: #{tpu_custom_call.1} parent=1 // pred_check_branch
      %21 = sbr.rel (0) target = $region9
    $region8: #{tpu_custom_call.1} parent=1 // pred_region
      %s23 = ssub.s32 1024, 1024
      %24 = vsyncadd [#allocation6], %s23
      %s25 = sshll.u32 [#allocation5], 4
      %s26 = int_to_ptr.vmem [resolvable:$true] %s25
      %31 = dma.hbm_to_vmem [thread:$0]  %s1, 1024, %s26, [#allocation6], 64, 64, 4
    $region9: #{tpu_custom_call.1} parent=1 // pred_fallthru
      _
    // Predicated region
    $region10: #{tpu_custom_call.1} parent=1 // pred_check
      _
    $region11: #{tpu_custom_call.1} parent=1 // pred_check_branch
      %33 = sbr.rel (0) target = $region13
    $region12: #{tpu_custom_call.1} parent=1 // pred_region
      %34 = dma.done [#allocation3], 128
    $region13: #{tpu_custom_call.1} parent=1 // pred_fallthru
      _
    // Predicated region
    $region14: #{tpu_custom_call.1} parent=1 // pred_check
      _
    $region15: #{tpu_custom_call.1} parent=1 // pred_check_branch
      %36 = sbr.rel (0) target = $region17
    $region16: #{tpu_custom_call.1} parent=1 // pred_region
      %37 = dma.done [#allocation6], 1024
    $region17: #{tpu_custom_call.1} parent=1 // pred_fallthru
      _
    %v39 = vld [vmem:[#allocation2] sm:$0xff]
    %v40 = vlaneseq
    %v41 = vand.u32 %v40, 127
    %42 = vset.pattern.permute.xlu0 0
    %43 = vperm.xlu0 %42, %v39
    %v44 = vpop.permute.xlu0 %43
    %vm45 = vcmp.eq.s32.totalorder %v41, %v44
    %46 = vset.pattern.permute.xlu0 1
    %47 = vperm.xlu0 %46, %v39
    %v48 = vpop.permute.xlu0 %47
    %vm49 = vcmp.eq.s32.totalorder %v41, %v48
    %vm50 = vmor %vm45, %vm49
    %51 = vset.pattern.permute.xlu0 2
    %52 = vperm.xlu0 %51, %v39
    %v53 = vpop.permute.xlu0 %52
    %vm54 = vcmp.eq.s32.totalorder %v41, %v53
    %vm55 = vmor %vm50, %vm54
    %56 = vset.pattern.permute.xlu0 3
    %57 = vperm.xlu0 %56, %v39
    %v58 = vpop.permute.xlu0 %57
    %vm59 = vcmp.eq.s32.totalorder %v41, %v58
    %vm60 = vmor %vm55, %vm59
    %61 = vset.pattern.permute.xlu0 4
    %62 = vperm.xlu0 %61, %v39
    %v63 = vpop.permute.xlu0 %62
    %vm64 = vcmp.eq.s32.totalorder %v41, %v63
    %vm65 = vmor %vm60, %vm64
    %66 = vset.pattern.permute.xlu0 5
    %67 = vperm.xlu0 %66, %v39
    %v68 = vpop.permute.xlu0 %67
    %vm69 = vcmp.eq.s32.totalorder %v41, %v68
    %vm70 = vmor %vm65, %vm69
    %71 = vset.pattern.permute.xlu0 6
    %72 = vperm.xlu0 %71, %v39
    %v73 = vpop.permute.xlu0 %72
    %vm74 = vcmp.eq.s32.totalorder %v41, %v73
    %vm75 = vmor %vm70, %vm74
    %76 = vset.pattern.permute.xlu0 7
    %77 = vperm.xlu0 %76, %v39
    %v78 = vpop.permute.xlu0 %77
    %vm79 = vcmp.eq.s32.totalorder %v41, %v78
    %vm80 = vmor %vm75, %vm79
    %81 = vset.pattern.permute.xlu0 8
    %82 = vperm.xlu0 %81, %v39
    %v83 = vpop.permute.xlu0 %82
    %vm84 = vcmp.eq.s32.totalorder %v41, %v83
    %vm85 = vmor %vm80, %vm84
    %86 = vset.pattern.permute.xlu0 9
    %87 = vperm.xlu0 %86, %v39
    %v88 = vpop.permute.xlu0 %87
    %vm89 = vcmp.eq.s32.totalorder %v41, %v88
    %vm90 = vmor %vm85, %vm89
    %91 = vset.pattern.permute.xlu0 10
    %92 = vperm.xlu0 %91, %v39
    %v93 = vpop.permute.xlu0 %92
    %vm94 = vcmp.eq.s32.totalorder %v41, %v93
    %vm95 = vmor %vm90, %vm94
    %96 = vset.pattern.permute.xlu0 11
    %97 = vperm.xlu0 %96, %v39
    %v98 = vpop.permute.xlu0 %97
    %vm99 = vcmp.eq.s32.totalorder %v41, %v98
    %vm100 = vmor %vm95, %vm99
    %101 = vset.pattern.permute.xlu0 12
    %102 = vperm.xlu0 %101, %v39
    %v103 = vpop.permute.xlu0 %102
    %vm104 = vcmp.eq.s32.totalorder %v41, %v103
    %vm105 = vmor %vm100, %vm104
    %106 = vset.pattern.permute.xlu0 13
    %107 = vperm.xlu0 %106, %v39
    %v108 = vpop.permute.xlu0 %107
    %vm109 = vcmp.eq.s32.totalorder %v41, %v108
    %vm110 = vmor %vm105, %vm109
    %111 = vset.pattern.permute.xlu0 14
    %112 = vperm.xlu0 %111, %v39
    %v113 = vpop.permute.xlu0 %112
    %vm114 = vcmp.eq.s32.totalorder %v41, %v113
    %vm115 = vmor %vm110, %vm114
    %116 = vset.pattern.permute.xlu0 15
    %117 = vperm.xlu0 %116, %v39
    %v118 = vpop.permute.xlu0 %117
    %vm119 = vcmp.eq.s32.totalorder %v41, %v118
    %vm120 = vmor %vm115, %vm119
    %v121 = vsel %vm120, 1, 0
    %v122 = vcvt.s32.f32 %v121
    %v123 = vpack.c.bf16 %v122, %v122
    %v124 = vld [vmem:[#allocation5] sm:$0xf]
    %v125 = vld [vmem:[#allocation5 + $0x4] sm:$0xf]
    %v126 = vld [vmem:[#allocation5 + $0x8] sm:$0xf]
    %v127 = vld [vmem:[#allocation5 + $0xc] sm:$0xf]
    %v128 = vld [vmem:[#allocation5 + $0x10] sm:$0xf]
    %v129 = vld [vmem:[#allocation5 + $0x14] sm:$0xf]
    %v130 = vld [vmem:[#allocation5 + $0x18] sm:$0xf]
    %v131 = vld [vmem:[#allocation5 + $0x1c] sm:$0xf]
    %v132 = vld [vmem:[#allocation5 + $0x20] sm:$0xf]
    %v133 = vld [vmem:[#allocation5 + $0x24] sm:$0xf]
    %v134 = vld [vmem:[#allocation5 + $0x28] sm:$0xf]
    %v135 = vld [vmem:[#allocation5 + $0x2c] sm:$0xf]
    %v136 = vld [vmem:[#allocation5 + $0x30] sm:$0xf]
    %v137 = vld [vmem:[#allocation5 + $0x34] sm:$0xf]
    %v138 = vld [vmem:[#allocation5 + $0x38] sm:$0xf]
    %v139 = vld [vmem:[#allocation5 + $0x3c] sm:$0xf]
    %v156 = vunpack.c.l.b16 %v124
    %v157 = vunpack.c.l.b16 %v125
    %v158 = vunpack.c.l.b16 %v126
    %v159 = vunpack.c.l.b16 %v127
    %v160 = vunpack.c.l.b16 %v128
    %v161 = vunpack.c.l.b16 %v129
    %v162 = vunpack.c.l.b16 %v130
    %v163 = vunpack.c.l.b16 %v131
    %v164 = vunpack.c.l.b16 %v132
    %v165 = vunpack.c.l.b16 %v133
    %v166 = vunpack.c.l.b16 %v134
    %v167 = vunpack.c.l.b16 %v135
    %v168 = vunpack.c.l.b16 %v136
    %v169 = vunpack.c.l.b16 %v137
    %v170 = vunpack.c.l.b16 %v138
    %v171 = vunpack.c.l.b16 %v139
    %v172 = vpack.c.b16 %v157, %v156
    %v173 = vpack.c.b16 %v159, %v158
    %v174 = vpack.c.b16 %v161, %v160
    %v175 = vpack.c.b16 %v163, %v162
    %v176 = vpack.c.b16 %v165, %v164
    %v177 = vpack.c.b16 %v167, %v166
    %v178 = vpack.c.b16 %v169, %v168
    %v179 = vpack.c.b16 %v171, %v170
    %188 = vmatprep.subr.bf16.mxu0 0
    %189 = vmatpush1.bf16.msra.mxu0 %v172
    %190 = vmatprep.subr.bf16.mxu0 0
    %191 = vmatpush1.bf16.msra.mxu0 %v173
    %192 = vmatprep.subr.bf16.mxu0 0
    %193 = vmatpush1.bf16.msra.mxu0 %v174
    %194 = vmatprep.subr.bf16.mxu0 0
    %195 = vmatpush1.bf16.msra.mxu0 %v175
    %196 = vmatprep.subr.bf16.mxu0 0
    %197 = vmatpush1.bf16.msra.mxu0 %v176
    %198 = vmatprep.subr.bf16.mxu0 0
    %199 = vmatpush1.bf16.msra.mxu0 %v177
    %200 = vmatprep.subr.bf16.mxu0 0
    %201 = vmatpush1.bf16.msra.mxu0 %v178
    %202 = vmatprep.subr.bf16.mxu0 0
    %203 = vmatpush1.bf16.msra.mxu0 %v179
    %204 = vmatprep.subr.bf16.mxu0 0
    %205 = vmatpush1.bf16.msra.mxu0 0
    %206 = vmatprep.subr.bf16.mxu0 0
    %207 = vmatpush1.bf16.msra.mxu0 0
    %208 = vmatprep.subr.bf16.mxu0 0
    %209 = vmatpush1.bf16.msra.mxu0 0
    %210 = vmatprep.subr.bf16.mxu0 0
    %211 = vmatpush1.bf16.msra.mxu0 0
    %212 = vmatprep.subr.bf16.mxu0 0
    %213 = vmatpush1.bf16.msra.mxu0 0
    %214 = vmatprep.subr.bf16.mxu0 0
    %215 = vmatpush1.bf16.msra.mxu0 0
    %216 = vmatprep.subr.bf16.mxu0 0
    %217 = vmatpush1.bf16.msra.mxu0 0
    %218 = vmatprep.subr.bf16.mxu0 0
    %219 = vmatpush1.bf16.msra.mxu0 0
    %220 = vmatprep.mubr.bf16.mxu0 0
    %221 = vmatmul.mubr.bf16.gmra.mrb[0].mxu0 %v123
    %v222 = vpop.f32.mrb[0].mxu0
    %v223 = vadd.f32 0.0, %v222
    %v224 = vpop.f32.mrb[0].mxu0
    %v225 = vpop.f32.mrb[0].mxu0
    %v226 = vpop.f32.mrb[0].mxu0
    %227 = vdwg.mxu0
    %228 = vst [vmem:[#allocation7] sm:$0xff] %v223
    // Predicated region
    $region18: #{tpu_custom_call.1} parent=1 // pred_check
      _
    $region19: #{tpu_custom_call.1} parent=1 // pred_check_branch
      %230 = sbr.rel (0) target = $region21
    $region20: #{tpu_custom_call.1} parent=1 // pred_region
      %s232 = ssub.s32 128, 128
      %233 = vsyncadd [#allocation4], %s232
      %s235 = sshll.u32 [#allocation7], 4
      %s236 = int_to_ptr.vmem [resolvable:$true] %s235
      %238 = dma.vmem_to_hbm [thread:$0]  %s236, 128, %s2, [#allocation4]
    $region21: #{tpu_custom_call.1} parent=1 // pred_fallthru
      _
    // Predicated region
    $region22: #{tpu_custom_call.1} parent=1 // pred_check
      _
    $region23: #{tpu_custom_call.1} parent=1 // pred_check_branch
      %240 = sbr.rel (0) target = $region25
    $region24: #{tpu_custom_call.1} parent=1 // pred_region
      %241 = dma.done [#allocation4], 128
    $region25: #{tpu_custom_call.1} parent=1 // pred_fallthru
      _
    %242 = vsyncpa [#allocation3], 1
    %243 = vsyncpa [#allocation6], 1
    %244 = vsyncpa [#allocation4], 1

</llo_original>
